<compile_context>
chip_gen: v7x
topology: tpu7x:2x2x1
jax: 0.10.0
libtpu: 0.0.40
codegen_flags: <defaults>
</compile_context>

<pallas_src>
import functools

import jax
import jax.numpy as jnp
from jax.experimental import pallas as pl
from jax.experimental.pallas import tpu as pltpu

_SQRT_HALF = 0.7071067811865476  # 1/sqrt(2)

# Conservative per-core VMEM working-set target: fits v7x's 64 MiB physical
# VMEM with headroom; well under v5e/v6e's 128 MiB.
_VMEM_TARGET_BYTES = 48 * 1024 * 1024
# Grid-resident operands at least this large are requested single-buffered so
# the constant-index weight slab does not double its VMEM footprint.
_SINGLE_BUFFER_THRESHOLD = 2 * 1024 * 1024


def _gelu_exact(x):
    # Exact (erf-based) GELU == torch.nn.GELU() default.
    # (jax.nn.gelu(approximate=True) would move the activation to the EUP slot,
    #  but changes numerics; keep erf for 1e-5 parity with torch.)
    return 0.5 * x * (1.0 + jax.lax.erf(x * _SQRT_HALF))


def _round_up(n, m):
    return ((n + m - 1) // m) * m


def _mlp_kernel(x_ref, w_in_ref, b_in_ref, w_hid_ref, b_hid_ref,
                w_out_ref, b_out_ref, o_ref, *, num_layers):
    """One batch tile of the MLP.

    x_ref: (TB, I_pad)        w_in_ref:  (I_pad, H_pad)  b_in_ref:  (1, H_pad)
    w_hid_ref: (H_pad, H_pad) b_hid_ref: (1, H_pad)
    w_out_ref: (H_pad, O_pad) b_out_ref: (1, O_pad)      o_ref: (TB, O_pad)

    Zero padding is self-consistent: padded lanes of every intermediate stay
    exactly 0 (GELU(0) == 0; padded weight rows/cols and bias lanes are 0).
    """
    tb = x_ref.shape[0]
    h_pad = w_hid_ref.shape[1]

    h = jnp.dot(x_ref[...], w_in_ref[...], preferred_element_type=jnp.float32)
    h = _gelu_exact(h + b_in_ref[...])

    # Shared hidden layer: load once, hoist the bias broadcast out of the
    # unrolled loop (JAX does not CSE broadcast_in_dim).
    w_hid = w_hid_ref[...]
    b_hid = jnp.broadcast_to(b_hid_ref[...], (tb, h_pad))
    for _ in range(num_layers - 1):
        h = _gelu_exact(
            jnp.dot(h, w_hid, preferred_element_type=jnp.float32) + b_hid)

    out = jnp.dot(h, w_out_ref[...], preferred_element_type=jnp.float32)
    o_ref[...] = (out + b_out_ref[...]).astype(o_ref.dtype)


def pack_params(params, *, param_dtype=jnp.float32):
    """Pad/transpose torch-convention params ONCE; cache and reuse the result.

    Each layer keeps its own padded width (lane multiple of 128): streamed
    x/out traffic scales with I/O, not with hidden_dim.  param_dtype=bfloat16
    halves weight VMEM and gives ~2-4x MXU throughput (f32 accumulation kept),
    at a numerics cost.
    """
    def pad_wt(w, rows, cols):   # torch (out, in) -> padded (in_pad, out_pad)
        wt = jnp.asarray(w, jnp.float32).T
        out = jnp.zeros((rows, cols), jnp.float32)
        return out.at[:wt.shape[0], :wt.shape[1]].set(wt).astype(param_dtype)

    def pad_b(b, cols):
        b = jnp.asarray(b, jnp.float32)
        out = jnp.zeros((1, cols), jnp.float32)
        return out.at[0, :b.shape[0]].set(b).astype(param_dtype)

    H, I = params["W_in"].shape
    O = params["W_out"].shape[0]
    I_pad, H_pad, O_pad = _round_up(I, 128), _round_up(H, 128), _round_up(O, 128)
    return dict(
        w_in=pad_wt(params["W_in"], I_pad, H_pad),
        b_in=pad_b(params["b_in"], H_pad),
        w_hid=pad_wt(params["W_hid"], H_pad, H_pad),
        b_hid=pad_b(params["b_hid"], H_pad),
        w_out=pad_wt(params["W_out"], H_pad, O_pad),
        b_out=pad_b(params["b_out"], O_pad),
    )


def _resident_spec(shape, nbytes):
    """Spec for a grid-resident operand (constant block index across batch).

    Large slabs are single-buffered so resident weights don't pay 2x VMEM for
    pipelining they never use (matters against v7x's 64 MiB physical VMEM)."""
    index_map = lambda i: (0,) * len(shape)
    if nbytes >= _SINGLE_BUFFER_THRESHOLD:
        return pl.BlockSpec(shape, index_map, pipeline_mode=pl.Buffered(1))
    return pl.BlockSpec(shape, index_map)


def net_forward(x, packed, *, num_layers, output_dim, block_batch=512):
    """Forward pass of Net (use_noisy=False).  `packed` comes from pack_params()."""
    B, I = x.shape
    I_pad, H_pad = packed["w_in"].shape
    O_pad = packed["w_out"].shape[1]
    x_itemsize = jnp.dtype(x.dtype).itemsize
    w_itemsize = jnp.dtype(packed["w_hid"].dtype).itemsize

    # --- batch tile selection --------------------------------------------
    block_batch = max(8, _round_up(int(block_batch), 8))       # (8,128) guard
    TB = min(_round_up(B, 8), block_batch)
    # v7x megacore: make sure the "parallel" batch grid has >= 2 steps when
    # there is enough batch to split (v5e/v6e: harmless).
    if B >= 16 and _round_up(B, TB) // TB < 2:
        TB = _round_up(pl.cdiv(_round_up(B, 8), 2), 8)

    # --- explicit VMEM budgeting -----------------------------------------
    w_bytes = sum(int(packed[k].size) * jnp.dtype(packed[k].dtype).itemsize
                  for k in ("w_in", "b_in", "w_hid", "b_hid", "w_out", "b_out"))

    def working_set(tb):
        # resident weights (single copy) + double-buffered x / out batch tiles
        return w_bytes + 2 * 2 * tb * (I_pad + O_pad) * x_itemsize

    while working_set(TB) > _VMEM_TARGET_BYTES and TB > 8:
        TB = max(8, _round_up(TB // 2, 8))
    vmem_limit = int(min(max(working_set(TB) * 5 // 4 + (1 << 20),
                             16 * 1024 * 1024),
                         128 * 1024 * 1024))

    B_pad = _round_up(B, TB)
    grid = (B_pad // TB,)

    x_p = jnp.zeros((B_pad, I_pad), x.dtype).at[:B, :I].set(x)

    kernel = functools.partial(_mlp_kernel, num_layers=num_layers)

    flops = 2 * B_pad * H_pad * (I_pad + (num_layers - 1) * H_pad + O_pad)
    transcendentals = B_pad * H_pad * num_layers
    bytes_accessed = (x_p.size * x_itemsize + w_bytes + B_pad * O_pad * x_itemsize)

    def nbytes(k):
        return int(packed[k].size) * w_itemsize

    out_p = pl.pallas_call(
        kernel,
        out_shape=jax.ShapeDtypeStruct((B_pad, O_pad), x.dtype),
        grid_spec=pltpu.PrefetchScalarGridSpec(
            num_scalar_prefetch=0,
            grid=grid,
            in_specs=[
                pl.BlockSpec((TB, I_pad), lambda i: (i, 0)),       # x, pipelined
                _resident_spec((I_pad, H_pad), nbytes("w_in")),
                _resident_spec((1, H_pad), nbytes("b_in")),
                _resident_spec((H_pad, H_pad), nbytes("w_hid")),
                _resident_spec((1, H_pad), nbytes("b_hid")),
                _resident_spec((H_pad, O_pad), nbytes("w_out")),
                _resident_spec((1, O_pad), nbytes("b_out")),
            ],
            out_specs=pl.BlockSpec((TB, O_pad), lambda i: (i, 0)),  # lane-dense
        ),
        compiler_params=pltpu.CompilerParams(
            dimension_semantics=("parallel",),
            vmem_limit_bytes=vmem_limit),
        cost_estimate=pl.CostEstimate(
            flops=int(flops),
            transcendentals=int(transcendentals),
            bytes_accessed=int(bytes_accessed)),
    )(x_p, packed["w_in"], packed["b_in"], packed["w_hid"], packed["b_hid"],
      packed["w_out"], packed["b_out"])

    return out_p[:B, :output_dim]


def init_params(key, input_dim, hidden_dim, output_dim):
    """Deterministic init mimicking nn.Linear's default (uniform +-1/sqrt(fan_in))."""
    def linear(key, in_dim, out_dim):
        kw, kb = jax.random.split(key)
        bound = 1.0 / jnp.sqrt(in_dim)
        w = jax.random.uniform(kw, (out_dim, in_dim), jnp.float32, -bound, bound)
        b = jax.random.uniform(kb, (out_dim,), jnp.float32, -bound, bound)
        return w, b

    k1, k2, k3 = jax.random.split(key, 3)
    W_in, b_in = linear(k1, input_dim, hidden_dim)
    W_hid, b_hid = linear(k2, hidden_dim, hidden_dim)
    W_out, b_out = linear(k3, hidden_dim, output_dim)
    return dict(W_in=W_in, b_in=b_in, W_hid=W_hid, b_hid=b_hid,
                W_out=W_out, b_out=b_out)


def _reference(x, params, num_layers):
    hp = jax.lax.Precision.HIGHEST
    h = _gelu_exact(jnp.dot(x, params["W_in"].T, precision=hp) + params["b_in"])
    for _ in range(num_layers - 1):
        h = _gelu_exact(jnp.dot(h, params["W_hid"].T, precision=hp) + params["b_hid"])
    return jnp.dot(h, params["W_out"].T, precision=hp) + params["b_out"]


if __name__ == "__main__":
    # Pendulum-v1-ish sizes: tiny MLP.  batch=16 so the parallel batch grid has
    # 2 steps (exercises weight residency across steps / megacore path).
    num_layers = 3
    batch, input_dim, hidden_dim, output_dim = 16, 3, 32, 5

    key = jax.random.PRNGKey(0)
    kx, kp = jax.random.split(key)
    x = jax.random.normal(kx, (batch, input_dim), dtype=jnp.float32)
    params = init_params(kp, input_dim, hidden_dim, output_dim)

    packed = pack_params(params)            # pack/pad ONCE, reuse every call
    fwd = jax.jit(functools.partial(
        net_forward, num_layers=num_layers, output_dim=output_dim))

    out = jax.block_until_ready(fwd(x, packed))

    ref = _reference(x, params, num_layers)
    assert out.shape == (batch, output_dim)
    assert jnp.allclose(out, ref, atol=1e-5, rtol=1e-5)

    print("KERNEL_OK")
</pallas_src>

<mosaic_0001>
module attributes {stable_mosaic.version = 11 : i64} {
  func.func @_mlp_kernel(%arg0: i32, %arg1: memref<8x128xf32, #tpu.memory_space<vmem>>, %arg2: memref<128x128xf32, #tpu.memory_space<vmem>>, %arg3: memref<1x128xf32, #tpu.memory_space<vmem>>, %arg4: memref<128x128xf32, #tpu.memory_space<vmem>>, %arg5: memref<1x128xf32, #tpu.memory_space<vmem>>, %arg6: memref<128x128xf32, #tpu.memory_space<vmem>>, %arg7: memref<1x128xf32, #tpu.memory_space<vmem>>, %arg8: memref<8x128xf32, #tpu.memory_space<vmem>>) attributes {dimension_semantics = [#tpu.dimension_semantics<parallel>], iteration_bounds = array<i64: 2>, scalar_prefetch = 0 : i64, scratch_operands = 0 : i64, tpu.core_type = #tpu.core_type<tc>, window_params = [{transform_indices = @transform_0, window_bounds = array<i64: 8, 128>}, {pipeline_mode = #tpu.pipeline_mode<synchronous>, transform_indices = @transform_1, window_bounds = array<i64: 128, 128>}, {pipeline_mode = #tpu.pipeline_mode<synchronous>, transform_indices = @transform_2, window_bounds = array<i64: 1, 128>}, {pipeline_mode = #tpu.pipeline_mode<synchronous>, transform_indices = @transform_3, window_bounds = array<i64: 128, 128>}, {pipeline_mode = #tpu.pipeline_mode<synchronous>, transform_indices = @transform_4, window_bounds = array<i64: 1, 128>}, {pipeline_mode = #tpu.pipeline_mode<synchronous>, transform_indices = @transform_5, window_bounds = array<i64: 128, 128>}, {pipeline_mode = #tpu.pipeline_mode<synchronous>, transform_indices = @transform_6, window_bounds = array<i64: 1, 128>}, {transform_indices = @transform_7, window_bounds = array<i64: 8, 128>}]} {
    %c0 = arith.constant 0 : index
    %c0_0 = arith.constant 0 : index
    %0 = vector.load %arg1[%c0, %c0_0] : memref<8x128xf32, #tpu.memory_space<vmem>>, vector<8x128xf32>
    %c0_1 = arith.constant 0 : index
    %c0_2 = arith.constant 0 : index
    %1 = vector.load %arg2[%c0_1, %c0_2] : memref<128x128xf32, #tpu.memory_space<vmem>>, vector<128x128xf32>
    %cst = arith.constant dense<0.000000e+00> : vector<8x128xf32>
    %2 = tpu.matmul %0, %1, %cst {dimension_numbers = #tpu.dot_dimension_numbers<[1], [0], [0], [1], [0, 0, 1, 1], [], []>} : vector<8x128xf32>, vector<128x128xf32>, vector<8x128xf32> -> vector<8x128xf32>
    %c0_3 = arith.constant 0 : index
    %c0_4 = arith.constant 0 : index
    %3 = vector.load %arg3[%c0_3, %c0_4] : memref<1x128xf32, #tpu.memory_space<vmem>>, vector<1x128xf32>
    %4 = vector.broadcast %3 : vector<1x128xf32> to vector<8x128xf32>
    %5 = arith.addf %2, %4 : vector<8x128xf32>
    %cst_5 = arith.constant 5.000000e-01 : f32
    %6 = vector.broadcast %cst_5 : f32 to vector<8x128xf32>
    %7 = arith.mulf %6, %5 : vector<8x128xf32>
    %cst_6 = arith.constant 0.707106769 : f32
    %8 = vector.broadcast %cst_6 : f32 to vector<8x128xf32>
    %9 = arith.mulf %5, %8 : vector<8x128xf32>
    %10 = math.erf %9 : vector<8x128xf32>
    %cst_7 = arith.constant 1.000000e+00 : f32
    %11 = vector.broadcast %cst_7 : f32 to vector<8x128xf32>
    %12 = arith.addf %11, %10 : vector<8x128xf32>
    %13 = arith.mulf %7, %12 : vector<8x128xf32>
    %c0_8 = arith.constant 0 : index
    %c0_9 = arith.constant 0 : index
    %14 = vector.load %arg4[%c0_8, %c0_9] : memref<128x128xf32, #tpu.memory_space<vmem>>, vector<128x128xf32>
    %c0_10 = arith.constant 0 : index
    %c0_11 = arith.constant 0 : index
    %15 = vector.load %arg5[%c0_10, %c0_11] : memref<1x128xf32, #tpu.memory_space<vmem>>, vector<1x128xf32>
    %16 = vector.shape_cast %15 : vector<1x128xf32> to vector<1x128xf32>
    %17 = vector.broadcast %16 : vector<1x128xf32> to vector<8x128xf32>
    %cst_12 = arith.constant dense<0.000000e+00> : vector<8x128xf32>
    %18 = tpu.matmul %13, %14, %cst_12 {dimension_numbers = #tpu.dot_dimension_numbers<[1], [0], [0], [1], [0, 0, 1, 1], [], []>} : vector<8x128xf32>, vector<128x128xf32>, vector<8x128xf32> -> vector<8x128xf32>
    %19 = arith.addf %18, %17 : vector<8x128xf32>
    %cst_13 = arith.constant 5.000000e-01 : f32
    %20 = vector.broadcast %cst_13 : f32 to vector<8x128xf32>
    %21 = arith.mulf %20, %19 : vector<8x128xf32>
    %cst_14 = arith.constant 0.707106769 : f32
    %22 = vector.broadcast %cst_14 : f32 to vector<8x128xf32>
    %23 = arith.mulf %19, %22 : vector<8x128xf32>
    %24 = math.erf %23 : vector<8x128xf32>
    %cst_15 = arith.constant 1.000000e+00 : f32
    %25 = vector.broadcast %cst_15 : f32 to vector<8x128xf32>
    %26 = arith.addf %25, %24 : vector<8x128xf32>
    %27 = arith.mulf %21, %26 : vector<8x128xf32>
    %cst_16 = arith.constant dense<0.000000e+00> : vector<8x128xf32>
    %28 = tpu.matmul %27, %14, %cst_16 {dimension_numbers = #tpu.dot_dimension_numbers<[1], [0], [0], [1], [0, 0, 1, 1], [], []>} : vector<8x128xf32>, vector<128x128xf32>, vector<8x128xf32> -> vector<8x128xf32>
    %29 = arith.addf %28, %17 : vector<8x128xf32>
    %cst_17 = arith.constant 5.000000e-01 : f32
    %30 = vector.broadcast %cst_17 : f32 to vector<8x128xf32>
    %31 = arith.mulf %30, %29 : vector<8x128xf32>
    %cst_18 = arith.constant 0.707106769 : f32
    %32 = vector.broadcast %cst_18 : f32 to vector<8x128xf32>
    %33 = arith.mulf %29, %32 : vector<8x128xf32>
    %34 = math.erf %33 : vector<8x128xf32>
    %cst_19 = arith.constant 1.000000e+00 : f32
    %35 = vector.broadcast %cst_19 : f32 to vector<8x128xf32>
    %36 = arith.addf %35, %34 : vector<8x128xf32>
    %37 = arith.mulf %31, %36 : vector<8x128xf32>
    %c0_20 = arith.constant 0 : index
    %c0_21 = arith.constant 0 : index
    %38 = vector.load %arg6[%c0_20, %c0_21] : memref<128x128xf32, #tpu.memory_space<vmem>>, vector<128x128xf32>
    %cst_22 = arith.constant dense<0.000000e+00> : vector<8x128xf32>
    %39 = tpu.matmul %37, %38, %cst_22 {dimension_numbers = #tpu.dot_dimension_numbers<[1], [0], [0], [1], [0, 0, 1, 1], [], []>} : vector<8x128xf32>, vector<128x128xf32>, vector<8x128xf32> -> vector<8x128xf32>
    %c0_23 = arith.constant 0 : index
    %c0_24 = arith.constant 0 : index
    %40 = vector.load %arg7[%c0_23, %c0_24] : memref<1x128xf32, #tpu.memory_space<vmem>>, vector<1x128xf32>
    %41 = vector.broadcast %40 : vector<1x128xf32> to vector<8x128xf32>
    %42 = arith.addf %39, %41 : vector<8x128xf32>
    %c0_25 = arith.constant 0 : index
    %c0_26 = arith.constant 0 : index
    %43 = vector.load %arg8[%c0_25, %c0_26] : memref<8x128xf32, #tpu.memory_space<vmem>>, vector<8x128xf32>
    tpu.vector_store %arg8[%c0_25, %c0_26], %42 {strides = array<i32>} : memref<8x128xf32, #tpu.memory_space<vmem>>, vector<8x128xf32>,
    return
  }
  func.func @transform_0(%arg0: i32) -> (i32, i32) {
    %c0_i32 = arith.constant 0 : i32
    %c0_i32_0 = arith.constant 0 : i32
    return %arg0, %c0_i32 : i32, i32
  }
  func.func @transform_1(%arg0: i32) -> (i32, i32) {
    %c0_i32 = arith.constant 0 : i32
    %c0_i32_0 = arith.constant 0 : i32
    %c0_i32_1 = arith.constant 0 : i32
    return %c0_i32, %c0_i32_0 : i32, i32
  }
  func.func @transform_2(%arg0: i32) -> (i32, i32) {
    %c0_i32 = arith.constant 0 : i32
    %c0_i32_0 = arith.constant 0 : i32
    %c0_i32_1 = arith.constant 0 : i32
    return %c0_i32, %c0_i32_0 : i32, i32
  }
  func.func @transform_3(%arg0: i32) -> (i32, i32) {
    %c0_i32 = arith.constant 0 : i32
    %c0_i32_0 = arith.constant 0 : i32
    %c0_i32_1 = arith.constant 0 : i32
    return %c0_i32, %c0_i32_0 : i32, i32
  }
  func.func @transform_4(%arg0: i32) -> (i32, i32) {
    %c0_i32 = arith.constant 0 : i32
    %c0_i32_0 = arith.constant 0 : i32
    %c0_i32_1 = arith.constant 0 : i32
    return %c0_i32, %c0_i32_0 : i32, i32
  }
  func.func @transform_5(%arg0: i32) -> (i32, i32) {
    %c0_i32 = arith.constant 0 : i32
    %c0_i32_0 = arith.constant 0 : i32
    %c0_i32_1 = arith.constant 0 : i32
    return %c0_i32, %c0_i32_0 : i32, i32
  }
  func.func @transform_6(%arg0: i32) -> (i32, i32) {
    %c0_i32 = arith.constant 0 : i32
    %c0_i32_0 = arith.constant 0 : i32
    %c0_i32_1 = arith.constant 0 : i32
    return %c0_i32, %c0_i32_0 : i32, i32
  }
  func.func @transform_7(%arg0: i32) -> (i32, i32) {
    %c0_i32 = arith.constant 0 : i32
    %c0_i32_0 = arith.constant 0 : i32
    return %arg0, %c0_i32 : i32, i32
  }
}

</mosaic_0001>

<llo_original>
// kernel: net_forward.1
$region0: #{net_forward.1}
  #allocation0 [shape = 'u32[]', space=smem, size = 0x4, offset = 0x4, fixed_abs, tag = 'smem constant byte address 0x4 - core index']
  #allocation1 [shape = 'u32[144,128]{1,0:T(1,128)}', space=vmem, size = 0x12000, scoped, tag = 'internal scratch']
  %s0 = inlined_call_operand.vmem [shape: f32[16,128], index: 0, kind: input, shape index: {}]
  %s1 = inlined_call_operand.hbm [shape: f32[128,128], index: 1, kind: input, shape index: {}]
  %s2 = inlined_call_operand.vmem [shape: f32[1,128], index: 2, kind: input, shape index: {}]
  %s3 = inlined_call_operand.hbm [shape: f32[128,128], index: 3, kind: input, shape index: {}]
  %s4 = inlined_call_operand.vmem [shape: f32[1,128], index: 4, kind: input, shape index: {}]
  %s5 = inlined_call_operand.hbm [shape: f32[128,128], index: 5, kind: input, shape index: {}]
  %s6 = inlined_call_operand.vmem [shape: f32[1,128], index: 6, kind: input, shape index: {}]
  %s7 = inlined_call_operand.vmem [shape: f32[16,128], index: 7, kind: output, shape index: {}]
  %s8 = sld [smem:[#allocation0]]
  $region73: #{net_forward.1} parent=0
    _
  %s10 = ssub.s32 1, %s8
  %s11 = scalar_select 0, %s10, %s8
  $region1: #{net_forward.1} parent=0
    #allocation2 [shape = 'u8[65536]{0}', space=vmem, size = 0x10000, scoped, tag = 'input window, operand 1, single buffered']
    #allocation3 [shape = 's32[2]{0}', space=sflag, size = 0x8, scoped, tag = 'scoped memory for net_forward.1']
    #allocation4 [shape = 'u8[65536]{0}', space=vmem, size = 0x10000, scoped, tag = 'input window, operand 3, single buffered']
    #allocation5 [shape = 's32[1]{0}', space=sflag, size = 0x4, scoped, tag = 'scoped memory for net_forward.1']
    #allocation6 [shape = 'u8[65536]{0}', space=vmem, size = 0x10000, scoped, tag = 'input window, operand 5, single buffered']
    %12 = vsyncpa [#allocation3], 0
    %13 = vsyncpa [#allocation5], 0
    loop: start=0, step=1, limit=4
    $region2: #{net_forward.1} parent=1 // loop_pre_header
      _
    $region3: #{net_forward.1} parent=1 // loop_header
      %s15 = sphi 0, %s19
      %p16 = scmp.ge.s32.totalorder %s15, 4
      %s25 = sphi 0, %s27
      %s28 = sphi 0, %s25
      %s29 = sphi 0, %s28
      %s45 = sphi 0, %s29
      %s49 = sphi 0, %s49
      %s51 = sphi 0, %s49
      %s52 = sphi 0, %s51
      %s66 = sphi 0, %s52
      %s70 = sphi 0, %s70
      %s72 = sphi 0, %s70
      %s73 = sphi 0, %s72
      %s87 = sphi 0, %s73
      %s91 = sphi 0, %s91
      %s93 = sphi 0, %s91
      %s94 = sphi 0, %s93
      %s108 = sphi 0, %s94
      %s112 = sphi 0, %s112
      %s114 = sphi 0, %s112
      %s115 = sphi 0, %s114
      %s129 = sphi 0, %s115
      %s133 = sphi 0, %s133
      %s135 = sphi 0, %s133
      %s136 = sphi 0, %s135
      %s150 = sphi 0, %s136
      %s154 = sphi 0, %s154
      %s156 = sphi 0, %s154
      %s157 = sphi 0, %s156
      %s171 = sphi 0, %s157
      %s177 = sphi 0, %s179
      %s180 = sphi 0, %s177
      %s181 = sphi 0, %s180
      %s197 = sphi 0, %s181
    $region4: #{net_forward.1} parent=1 // loop_header_branch
      %18 = sbr.rel (%p16) target = $region8
    $region5: #{net_forward.1} parent=1 // loop_body
      %s20 = ssub.s32 %s15, 1
      %s21 = ssub.s32 %s15, 2
      %s22 = sadd.s32 %s15, 1
      %s23 = ssub.s32 %s15, %s22
      %p24 = scmp.eq.s32.totalorder %s23, 0
      %s26 = sadd.s32 %s25, 1
      %s27 = scalar_select %p24, %s25, %s26
      %p30 = pneg %p24
      %p31 = scmp.eq.s32.totalorder %s15, 1
      %p32 = por %p30, %p31
      %p33 = scmp.ne.s32.totalorder %s25, %s28
      %p34 = scmp.eq.s32.totalorder %s15, 0
      %p35 = por %p33, %p34
      %p36 = scmp.ne.s32.totalorder %s25, %s28
      %p37 = scmp.eq.s32.totalorder %s20, 1
      %p38 = por %p36, %p37
      %p39 = scmp.ne.s32.totalorder %s28, %s29
      %p40 = scmp.eq.s32.totalorder %s20, 0
      %p41 = por %p39, %p40
      %p42 = scmp.ne.s32.totalorder %s28, %s29
      %p43 = scmp.eq.s32.totalorder %s21, 1
      %p44 = por %p42, %p43
      %p46 = scmp.ne.s32.totalorder %s29, %s45
      %p47 = scmp.eq.s32.totalorder %s21, 0
      %p48 = por %p46, %p47
      %s50 = sadd.s32 %s49, 1
      %p53 = scmp.eq.s32.totalorder %s15, 1
      %p54 = scmp.ne.s32.totalorder %s49, %s51
      %p55 = scmp.eq.s32.totalorder %s15, 0
      %p56 = por %p54, %p55
      %p57 = scmp.ne.s32.totalorder %s49, %s51
      %p58 = scmp.eq.s32.totalorder %s20, 1
      %p59 = por %p57, %p58
      %p60 = scmp.ne.s32.totalorder %s51, %s52
      %p61 = scmp.eq.s32.totalorder %s20, 0
      %p62 = por %p60, %p61
      %p63 = scmp.ne.s32.totalorder %s51, %s52
      %p64 = scmp.eq.s32.totalorder %s21, 1
      %p65 = por %p63, %p64
      %p67 = scmp.ne.s32.totalorder %s52, %s66
      %p68 = scmp.eq.s32.totalorder %s21, 0
      %p69 = por %p67, %p68
      %s71 = sadd.s32 %s70, 1
      %p74 = scmp.eq.s32.totalorder %s15, 1
      %p75 = scmp.ne.s32.totalorder %s70, %s72
      %p76 = scmp.eq.s32.totalorder %s15, 0
      %p77 = por %p75, %p76
      %p78 = scmp.ne.s32.totalorder %s70, %s72
      %p79 = scmp.eq.s32.totalorder %s20, 1
      %p80 = por %p78, %p79
      %p81 = scmp.ne.s32.totalorder %s72, %s73
      %p82 = scmp.eq.s32.totalorder %s20, 0
      %p83 = por %p81, %p82
      %p84 = scmp.ne.s32.totalorder %s72, %s73
      %p85 = scmp.eq.s32.totalorder %s21, 1
      %p86 = por %p84, %p85
      %p88 = scmp.ne.s32.totalorder %s73, %s87
      %p89 = scmp.eq.s32.totalorder %s21, 0
      %p90 = por %p88, %p89
      %s92 = sadd.s32 %s91, 1
      %p95 = scmp.eq.s32.totalorder %s15, 1
      %p96 = scmp.ne.s32.totalorder %s91, %s93
      %p97 = scmp.eq.s32.totalorder %s15, 0
      %p98 = por %p96, %p97
      %p99 = scmp.ne.s32.totalorder %s91, %s93
      %p100 = scmp.eq.s32.totalorder %s20, 1
      %p101 = por %p99, %p100
      %p102 = scmp.ne.s32.totalorder %s93, %s94
      %p103 = scmp.eq.s32.totalorder %s20, 0
      %p104 = por %p102, %p103
      %p105 = scmp.ne.s32.totalorder %s93, %s94
      %p106 = scmp.eq.s32.totalorder %s21, 1
      %p107 = por %p105, %p106
      %p109 = scmp.ne.s32.totalorder %s94, %s108
      %p110 = scmp.eq.s32.totalorder %s21, 0
      %p111 = por %p109, %p110
      %s113 = sadd.s32 %s112, 1
      %p116 = scmp.eq.s32.totalorder %s15, 1
      %p117 = scmp.ne.s32.totalorder %s112, %s114
      %p118 = scmp.eq.s32.totalorder %s15, 0
      %p119 = por %p117, %p118
      %p120 = scmp.ne.s32.totalorder %s112, %s114
      %p121 = scmp.eq.s32.totalorder %s20, 1
      %p122 = por %p120, %p121
      %p123 = scmp.ne.s32.totalorder %s114, %s115
      %p124 = scmp.eq.s32.totalorder %s20, 0
      %p125 = por %p123, %p124
      %p126 = scmp.ne.s32.totalorder %s114, %s115
      %p127 = scmp.eq.s32.totalorder %s21, 1
      %p128 = por %p126, %p127
      %p130 = scmp.ne.s32.totalorder %s115, %s129
      %p131 = scmp.eq.s32.totalorder %s21, 0
      %p132 = por %p130, %p131
      %s134 = sadd.s32 %s133, 1
      %p137 = scmp.eq.s32.totalorder %s15, 1
      %p138 = scmp.ne.s32.totalorder %s133, %s135
      %p139 = scmp.eq.s32.totalorder %s15, 0
      %p140 = por %p138, %p139
      %p141 = scmp.ne.s32.totalorder %s133, %s135
      %p142 = scmp.eq.s32.totalorder %s20, 1
      %p143 = por %p141, %p142
      %p144 = scmp.ne.s32.totalorder %s135, %s136
      %p145 = scmp.eq.s32.totalorder %s20, 0
      %p146 = por %p144, %p145
      %p147 = scmp.ne.s32.totalorder %s135, %s136
      %p148 = scmp.eq.s32.totalorder %s21, 1
      %p149 = por %p147, %p148
      %p151 = scmp.ne.s32.totalorder %s136, %s150
      %p152 = scmp.eq.s32.totalorder %s21, 0
      %p153 = por %p151, %p152
      %s155 = sadd.s32 %s154, 1
      %p158 = scmp.eq.s32.totalorder %s15, 1
      %p159 = scmp.ne.s32.totalorder %s154, %s156
      %p160 = scmp.eq.s32.totalorder %s15, 0
      %p161 = por %p159, %p160
      %p162 = scmp.ne.s32.totalorder %s154, %s156
      %p163 = scmp.eq.s32.totalorder %s20, 1
      %p164 = por %p162, %p163
      %p165 = scmp.ne.s32.totalorder %s156, %s157
      %p166 = scmp.eq.s32.totalorder %s20, 0
      %p167 = por %p165, %p166
      %p168 = scmp.ne.s32.totalorder %s156, %s157
      %p169 = scmp.eq.s32.totalorder %s21, 1
      %p170 = por %p168, %p169
      %p172 = scmp.ne.s32.totalorder %s157, %s171
      %p173 = scmp.eq.s32.totalorder %s21, 0
      %p174 = por %p172, %p173
      %s175 = ssub.s32 %s15, %s22
      %p176 = scmp.eq.s32.totalorder %s175, 0
      %s178 = sadd.s32 %s177, 1
      %s179 = scalar_select %p176, %s177, %s178
      %p182 = pneg %p176
      %p183 = scmp.eq.s32.totalorder %s15, 1
      %p184 = por %p182, %p183
      %p185 = scmp.ne.s32.totalorder %s177, %s180
      %p186 = scmp.eq.s32.totalorder %s15, 0
      %p187 = por %p185, %p186
      %p188 = scmp.ne.s32.totalorder %s177, %s180
      %p189 = scmp.eq.s32.totalorder %s20, 1
      %p190 = por %p188, %p189
      %p191 = scmp.ne.s32.totalorder %s180, %s181
      %p192 = scmp.eq.s32.totalorder %s20, 0
      %p193 = por %p191, %p192
      %p194 = scmp.ne.s32.totalorder %s180, %s181
      %p195 = scmp.eq.s32.totalorder %s21, 1
      %p196 = por %p194, %p195
      %p198 = scmp.ne.s32.totalorder %s181, %s197
      %p199 = scmp.eq.s32.totalorder %s21, 0
      %p200 = por %p198, %p199
      %p201 = scmp.le.s32.totalorder 1, %s15
      %p202 = scmp.lt.s32.totalorder %s15, 3
      %p203 = pnand %p201, %p202
      %p204 = pneg %p203
      // Predicated region
      $region9: #{net_forward.1} parent=5 // pred_check
        _
      $region10: #{net_forward.1} parent=5 // pred_check_branch
        %206 = sbr.rel (%p203) target = $region12
      $region11: #{net_forward.1} parent=5 // pred_region
        %s207 = ssub.s32 %s15, 1
        // Predicated region
        $region13: #{net_forward.1} parent=11 // pred_check
          %p208 = pneg %p62
        $region14: #{net_forward.1} parent=11 // pred_check_branch
          %210 = sbr.rel (%p208) target = $region16
        $region15: #{net_forward.1} parent=11 // pred_region
          %s212 = ssub.s32 2048, 2048
          %213 = vsyncadd [#allocation3], %s212
          %s214 = sshll.u32 [#allocation2], 4
          %s215 = int_to_ptr.vmem [resolvable:$true] %s214
          %220 = dma.hbm_to_vmem [thread:$0]  %s1, 2048, %s215, [#allocation3], 128, 128, 8
        $region16: #{net_forward.1} parent=11 // pred_fallthru
          _
        // Predicated region
        $region17: #{net_forward.1} parent=11 // pred_check
          %p221 = pneg %p83
        $region18: #{net_forward.1} parent=11 // pred_check_branch
          %223 = sbr.rel (%p221) target = $region20
        $region19: #{net_forward.1} parent=11 // pred_region
          _
        $region20: #{net_forward.1} parent=11 // pred_fallthru
          _
        // Predicated region
        $region21: #{net_forward.1} parent=11 // pred_check
          %p224 = pneg %p104
        $region22: #{net_forward.1} parent=11 // pred_check_branch
          %226 = sbr.rel (%p224) target = $region24
        $region23: #{net_forward.1} parent=11 // pred_region
          %s228 = ssub.s32 2048, 2048
          %229 = vsyncadd [#allocation5], %s228
          %s230 = sshll.u32 [#allocation4], 4
          %s231 = int_to_ptr.vmem [resolvable:$true] %s230
          %236 = dma.hbm_to_vmem [thread:$0]  %s3, 2048, %s231, [#allocation5], 128, 128, 8
        $region24: #{net_forward.1} parent=11 // pred_fallthru
          _
        // Predicated region
        $region25: #{net_forward.1} parent=11 // pred_check
          %p237 = pneg %p125
        $region26: #{net_forward.1} parent=11 // pred_check_branch
          %239 = sbr.rel (%p237) target = $region28
        $region27: #{net_forward.1} parent=11 // pred_region
          _
        $region28: #{net_forward.1} parent=11 // pred_fallthru
          _
        // Predicated region
        $region29: #{net_forward.1} parent=11 // pred_check
          %p240 = pneg %p146
        $region30: #{net_forward.1} parent=11 // pred_check_branch
          %242 = sbr.rel (%p240) target = $region32
        $region31: #{net_forward.1} parent=11 // pred_region
          %s244 = ssub.s32 2048, 2048
          %245 = vsyncadd [#allocation5], %s244
          %s246 = sshll.u32 [#allocation6], 4
          %s247 = int_to_ptr.vmem [resolvable:$true] %s246
          %252 = dma.hbm_to_vmem [thread:$0]  %s5, 2048, %s247, [#allocation5], 128, 128, 8
        $region32: #{net_forward.1} parent=11 // pred_fallthru
          _
        // Predicated region
        $region33: #{net_forward.1} parent=11 // pred_check
          %p253 = pneg %p167
        $region34: #{net_forward.1} parent=11 // pred_check_branch
          %255 = sbr.rel (%p253) target = $region36
        $region35: #{net_forward.1} parent=11 // pred_region
          _
        $region36: #{net_forward.1} parent=11 // pred_fallthru
          _
      $region12: #{net_forward.1} parent=5 // pred_fallthru
        _
      %p256 = scmp.lt.s32.totalorder %s15, 2
      // Predicated region
      $region37: #{net_forward.1} parent=5 // pred_check
        %p257 = pneg %p256
      $region38: #{net_forward.1} parent=5 // pred_check_branch
        %259 = sbr.rel (%p257) target = $region40
      $region39: #{net_forward.1} parent=5 // pred_region
        // Predicated region
        $region41: #{net_forward.1} parent=39 // pred_check
          %p260 = pneg %p35
        $region42: #{net_forward.1} parent=39 // pred_check_branch
          %262 = sbr.rel (%p260) target = $region44
        $region43: #{net_forward.1} parent=39 // pred_region
          %p263 = scmp.lt.s32.totalorder %s15, 1
          %s264 = scalar_select %p263, %s15, 1
          %s265 = smul.addr %s264, 8
          %s266 = scalar_lea.vmem %s0, %s265
        $region44: #{net_forward.1} parent=39 // pred_fallthru
          _
      $region40: #{net_forward.1} parent=5 // pred_fallthru
        _
      %p267 = scmp.le.s32.totalorder 1, %s15
      %p268 = scmp.lt.s32.totalorder %s15, 3
      %p269 = pnand %p267, %p268
      %p270 = pneg %p269
      // Predicated region
      $region45: #{net_forward.1} parent=5 // pred_check
        _
      $region46: #{net_forward.1} parent=5 // pred_check_branch
        %272 = sbr.rel (%p269) target = $region48
      $region47: #{net_forward.1} parent=5 // pred_region
        %s273 = ssub.s32 %s15, 1
        // Predicated region
        $region49: #{net_forward.1} parent=47 // pred_check
          %p274 = pneg %p62
        $region50: #{net_forward.1} parent=47 // pred_check_branch
          %276 = sbr.rel (%p274) target = $region52
        $region51: #{net_forward.1} parent=47 // pred_region
          %277 = dma.done [#allocation3], 2048
        $region52: #{net_forward.1} parent=47 // pred_fallthru
          _
        // Predicated region
        $region53: #{net_forward.1} parent=47 // pred_check
          %p278 = pneg %p104
        $region54: #{net_forward.1} parent=47 // pred_check_branch
          %280 = sbr.rel (%p278) target = $region56
        $region55: #{net_forward.1} parent=47 // pred_region
          %281 = dma.done [#allocation5], 2048
        $region56: #{net_forward.1} parent=47 // pred_fallthru
          _
        // Predicated region
        $region57: #{net_forward.1} parent=47 // pred_check
          %p282 = pneg %p146
        $region58: #{net_forward.1} parent=47 // pred_check_branch
          %284 = sbr.rel (%p282) target = $region60
        $region59: #{net_forward.1} parent=47 // pred_region
          %285 = dma.done [#allocation5], 2048
        $region60: #{net_forward.1} parent=47 // pred_fallthru
          _
        %p286 = scmp.lt.s32.totalorder %s20, 1
        %s287 = scalar_select %p286, %s20, 1
        %s288 = smul.addr %s287, 8
        %s289 = scalar_lea.vmem %s0, %s288
        %p290 = pneg %p41
        %p291 = pneg %p38
        %p292 = pneg %p62
        %p293 = pneg %p59
        %p294 = pneg %p83
        %p295 = pneg %p80
        %p296 = pneg %p104
        %p297 = pneg %p101
        %p298 = pneg %p125
        %p299 = pneg %p122
        %p300 = pneg %p146
        %p301 = pneg %p143
        %p302 = pneg %p167
        %p303 = pneg %p164
        %p304 = pneg %p193
        %p305 = pneg %p190
        %p306 = scmp.lt.s32.totalorder %s20, 1
        %s307 = scalar_select %p306, %s20, 1
        %s308 = smul.addr %s307, 8
        %s309 = scalar_lea.vmem %s7, %s308
        %p310 = scmp.lt.s32.totalorder %s20, 1
        %s311 = scalar_select %p310, %s20, 1
        %s312 = smul.addr %s311, 8
        %s313 = scalar_lea.vmem %s0, %s312
        %p314 = scmp.lt.s32.totalorder %s20, 1
        %s315 = scalar_select %p314, %s20, 1
        %s316 = smul.addr %s315, 8
        %s317 = scalar_lea.vmem %s7, %s316
        %v318 = vld [vmem:[%s313] sm:$0xff]
        %v319 = vld [vmem:[#allocation2] sm:$0xff]
        %v320 = vld [vmem:[#allocation2 + $0x8] sm:$0xff]
        %v321 = vld [vmem:[#allocation2 + $0x10] sm:$0xff]
        %v322 = vld [vmem:[#allocation2 + $0x18] sm:$0xff]
        %v323 = vld [vmem:[#allocation2 + $0x20] sm:$0xff]
        %v324 = vld [vmem:[#allocation2 + $0x28] sm:$0xff]
        %v325 = vld [vmem:[#allocation2 + $0x30] sm:$0xff]
        %v326 = vld [vmem:[#allocation2 + $0x38] sm:$0xff]
        %v327 = vld [vmem:[#allocation2 + $0x40] sm:$0xff]
        %v328 = vld [vmem:[#allocation2 + $0x48] sm:$0xff]
        %v329 = vld [vmem:[#allocation2 + $0x50] sm:$0xff]
        %v330 = vld [vmem:[#allocation2 + $0x58] sm:$0xff]
        %v331 = vld [vmem:[#allocation2 + $0x60] sm:$0xff]
        %v332 = vld [vmem:[#allocation2 + $0x68] sm:$0xff]
        %v333 = vld [vmem:[#allocation2 + $0x70] sm:$0xff]
        %v334 = vld [vmem:[#allocation2 + $0x78] sm:$0xff]
        %v335 = vld [vmem:[%s2] sm:$0x1]
        %v337 = vlaneseq
        %v338 = vshrl.u32 %v337, 7
        %v339 = vsub.s32 0, %v338
        %v340 = vrot.slane %v335, %v339
        %342 = vmatprep.subr.mxu0 0.0
        %343 = vmatpush1.msra.mxu0 %v319
        %344 = vmatprep.subr.mxu0 0.0
        %345 = vmatpush1.msra.mxu0 %v320
        %346 = vmatprep.subr.mxu0 0.0
        %347 = vmatpush1.msra.mxu0 %v321
        %348 = vmatprep.subr.mxu0 0.0
        %349 = vmatpush1.msra.mxu0 %v322
        %350 = vmatprep.subr.mxu0 0.0
        %351 = vmatpush1.msra.mxu0 %v323
        %352 = vmatprep.subr.mxu0 0.0
        %353 = vmatpush1.msra.mxu0 %v324
        %354 = vmatprep.subr.mxu0 0.0
        %355 = vmatpush1.msra.mxu0 %v325
        %356 = vmatprep.subr.mxu0 0.0
        %357 = vmatpush1.msra.mxu0 %v326
        %358 = vmatprep.subr.mxu0 0.0
        %359 = vmatpush1.msra.mxu0 %v327
        %360 = vmatprep.subr.mxu0 0.0
        %361 = vmatpush1.msra.mxu0 %v328
        %362 = vmatprep.subr.mxu0 0.0
        %363 = vmatpush1.msra.mxu0 %v329
        %364 = vmatprep.subr.mxu0 0.0
        %365 = vmatpush1.msra.mxu0 %v330
        %366 = vmatprep.subr.mxu0 0.0
        %367 = vmatpush1.msra.mxu0 %v331
        %368 = vmatprep.subr.mxu0 0.0
        %369 = vmatpush1.msra.mxu0 %v332
        %370 = vmatprep.subr.mxu0 0.0
        %371 = vmatpush1.msra.mxu0 %v333
        %372 = vmatprep.subr.mxu0 0.0
        %373 = vmatpush1.msra.mxu0 %v334
        %374 = vmatprep.subr.mxu0 0.0
        %375 = vmatpush1.msra.mxu0 0.0
        %376 = vmatprep.subr.mxu0 0.0
        %377 = vmatpush1.msra.mxu0 0.0
        %378 = vmatprep.subr.mxu0 0.0
        %379 = vmatpush1.msra.mxu0 0.0
        %380 = vmatprep.subr.mxu0 0.0
        %381 = vmatpush1.msra.mxu0 0.0
        %382 = vmatprep.subr.mxu0 0.0
        %383 = vmatpush1.msra.mxu0 0.0
        %384 = vmatprep.subr.mxu0 0.0
        %385 = vmatpush1.msra.mxu0 0.0
        %386 = vmatprep.subr.mxu0 0.0
        %387 = vmatpush1.msra.mxu0 0.0
        %388 = vmatprep.subr.mxu0 0.0
        %389 = vmatpush1.msra.mxu0 0.0
        %390 = vmatprep.subr.mxu0 0.0
        %391 = vmatpush1.msra.mxu0 0.0
        %392 = vmatprep.subr.mxu0 0.0
        %393 = vmatpush1.msra.mxu0 0.0
        %394 = vmatprep.subr.mxu0 0.0
        %395 = vmatpush1.msra.mxu0 0.0
        %396 = vmatprep.subr.mxu0 0.0
        %397 = vmatpush1.msra.mxu0 0.0
        %398 = vmatprep.subr.mxu0 0.0
        %399 = vmatpush1.msra.mxu0 0.0
        %400 = vmatprep.subr.mxu0 0.0
        %401 = vmatpush1.msra.mxu0 0.0
        %402 = vmatprep.subr.mxu0 0.0
        %403 = vmatpush1.msra.mxu0 0.0
        %404 = vmatprep.subr.mxu0 0.0
        %405 = vmatpush1.msra.mxu0 0.0
        %406 = vmatprep.mubr.f32.mxu0 0.0
        %407 = vmatmul.mubr.f32.gmra.mrb[0].mxu0 %v318
        %v408 = vpop.f32.mrb[0].mxu0
        %v409 = vadd.f32 %v340, %v408
        %v410 = vpop.f32.mrb[0].mxu0
        %411 = vdwg.mxu0
        %v412 = vmul.f32 %v409, 0.5
        %v413 = vmul.f32 %v409, 0.70710677
        %v414 = verf.f32.pop %v413
        %v415 = vadd.f32 %v414, 1.0
        %v416 = vmul.f32 %v412, %v415
        %v417 = vld [vmem:[#allocation4] sm:$0xff]
        %v418 = vld [vmem:[#allocation4 + $0x8] sm:$0xff]
        %v419 = vld [vmem:[#allocation4 + $0x10] sm:$0xff]
        %v420 = vld [vmem:[#allocation4 + $0x18] sm:$0xff]
        %v421 = vld [vmem:[#allocation4 + $0x20] sm:$0xff]
        %v422 = vld [vmem:[#allocation4 + $0x28] sm:$0xff]
        %v423 = vld [vmem:[#allocation4 + $0x30] sm:$0xff]
        %v424 = vld [vmem:[#allocation4 + $0x38] sm:$0xff]
        %v425 = vld [vmem:[#allocation4 + $0x40] sm:$0xff]
        %v426 = vld [vmem:[#allocation4 + $0x48] sm:$0xff]
        %v427 = vld [vmem:[#allocation4 + $0x50] sm:$0xff]
        %v428 = vld [vmem:[#allocation4 + $0x58] sm:$0xff]
        %v429 = vld [vmem:[#allocation4 + $0x60] sm:$0xff]
        %v430 = vld [vmem:[#allocation4 + $0x68] sm:$0xff]
        %v431 = vld [vmem:[#allocation4 + $0x70] sm:$0xff]
        %v432 = vld [vmem:[#allocation4 + $0x78] sm:$0xff]
        %v433 = vld [vmem:[%s4] sm:$0x1]
        %v435 = vlaneseq
        %v436 = vshrl.u32 %v435, 7
        %v437 = vsub.s32 0, %v436
        %v438 = vrot.slane %v433, %v437
        %440 = vmatprep.subr.mxu0 0.0
        %441 = vmatpush1.msra.mxu0 %v417
        %442 = vmatprep.subr.mxu0 0.0
        %443 = vmatpush1.msra.mxu0 %v418
        %444 = vmatprep.subr.mxu0 0.0
        %445 = vmatpush1.msra.mxu0 %v419
        %446 = vmatprep.subr.mxu0 0.0
        %447 = vmatpush1.msra.mxu0 %v420
        %448 = vmatprep.subr.mxu0 0.0
        %449 = vmatpush1.msra.mxu0 %v421
        %450 = vmatprep.subr.mxu0 0.0
        %451 = vmatpush1.msra.mxu0 %v422
        %452 = vmatprep.subr.mxu0 0.0
        %453 = vmatpush1.msra.mxu0 %v423
        %454 = vmatprep.subr.mxu0 0.0
        %455 = vmatpush1.msra.mxu0 %v424
        %456 = vmatprep.subr.mxu0 0.0
        %457 = vmatpush1.msra.mxu0 %v425
        %458 = vmatprep.subr.mxu0 0.0
        %459 = vmatpush1.msra.mxu0 %v426
        %460 = vmatprep.subr.mxu0 0.0
        %461 = vmatpush1.msra.mxu0 %v427
        %462 = vmatprep.subr.mxu0 0.0
        %463 = vmatpush1.msra.mxu0 %v428
        %464 = vmatprep.subr.mxu0 0.0
        %465 = vmatpush1.msra.mxu0 %v429
        %466 = vmatprep.subr.mxu0 0.0
        %467 = vmatpush1.msra.mxu0 %v430
        %468 = vmatprep.subr.mxu0 0.0
        %469 = vmatpush1.msra.mxu0 %v431
        %470 = vmatprep.subr.mxu0 0.0
        %471 = vmatpush1.msra.mxu0 %v432
        %472 = vmatprep.subr.mxu0 0.0
        %473 = vmatpush1.msra.mxu0 0.0
        %474 = vmatprep.subr.mxu0 0.0
        %475 = vmatpush1.msra.mxu0 0.0
        %476 = vmatprep.subr.mxu0 0.0
        %477 = vmatpush1.msra.mxu0 0.0
        %478 = vmatprep.subr.mxu0 0.0
        %479 = vmatpush1.msra.mxu0 0.0
        %480 = vmatprep.subr.mxu0 0.0
        %481 = vmatpush1.msra.mxu0 0.0
        %482 = vmatprep.subr.mxu0 0.0
        %483 = vmatpush1.msra.mxu0 0.0
        %484 = vmatprep.subr.mxu0 0.0
        %485 = vmatpush1.msra.mxu0 0.0
        %486 = vmatprep.subr.mxu0 0.0
        %487 = vmatpush1.msra.mxu0 0.0
        %488 = vmatprep.subr.mxu0 0.0
        %489 = vmatpush1.msra.mxu0 0.0
        %490 = vmatprep.subr.mxu0 0.0
        %491 = vmatpush1.msra.mxu0 0.0
        %492 = vmatprep.subr.mxu0 0.0
        %493 = vmatpush1.msra.mxu0 0.0
        %494 = vmatprep.subr.mxu0 0.0
        %495 = vmatpush1.msra.mxu0 0.0
        %496 = vmatprep.subr.mxu0 0.0
        %497 = vmatpush1.msra.mxu0 0.0
        %498 = vmatprep.subr.mxu0 0.0
        %499 = vmatpush1.msra.mxu0 0.0
        %500 = vmatprep.subr.mxu0 0.0
        %501 = vmatpush1.msra.mxu0 0.0
        %502 = vmatprep.subr.mxu0 0.0
        %503 = vmatpush1.msra.mxu0 0.0
        %504 = vmatprep.mubr.f32.mxu0 0.0
        %505 = vmatmul.mubr.f32.gmra.mrb[0].mxu0 %v416
        %v506 = vpop.f32.mrb[0].mxu0
        %v507 = vadd.f32 %v438, %v506
        %v508 = vpop.f32.mrb[0].mxu0
        %509 = vdwg.mxu0
        %v510 = vmul.f32 %v507, 0.5
        %v511 = vmul.f32 %v507, 0.70710677
        %v512 = verf.f32.pop %v511
        %v513 = vadd.f32 %v512, 1.0
        %v514 = vmul.f32 %v510, %v513
        %515 = vmatprep.subr.mxu0 0.0
        %516 = vmatpush1.msra.mxu0 %v417
        %517 = vmatprep.subr.mxu0 0.0
        %518 = vmatpush1.msra.mxu0 %v418
        %519 = vmatprep.subr.mxu0 0.0
        %520 = vmatpush1.msra.mxu0 %v419
        %521 = vmatprep.subr.mxu0 0.0
        %522 = vmatpush1.msra.mxu0 %v420
        %523 = vmatprep.subr.mxu0 0.0
        %524 = vmatpush1.msra.mxu0 %v421
        %525 = vmatprep.subr.mxu0 0.0
        %526 = vmatpush1.msra.mxu0 %v422
        %527 = vmatprep.subr.mxu0 0.0
        %528 = vmatpush1.msra.mxu0 %v423
        %529 = vmatprep.subr.mxu0 0.0
        %530 = vmatpush1.msra.mxu0 %v424
        %531 = vmatprep.subr.mxu0 0.0
        %532 = vmatpush1.msra.mxu0 %v425
        %533 = vmatprep.subr.mxu0 0.0
        %534 = vmatpush1.msra.mxu0 %v426
        %535 = vmatprep.subr.mxu0 0.0
        %536 = vmatpush1.msra.mxu0 %v427
        %537 = vmatprep.subr.mxu0 0.0
        %538 = vmatpush1.msra.mxu0 %v428
        %539 = vmatprep.subr.mxu0 0.0
        %540 = vmatpush1.msra.mxu0 %v429
        %541 = vmatprep.subr.mxu0 0.0
        %542 = vmatpush1.msra.mxu0 %v430
        %543 = vmatprep.subr.mxu0 0.0
        %544 = vmatpush1.msra.mxu0 %v431
        %545 = vmatprep.subr.mxu0 0.0
        %546 = vmatpush1.msra.mxu0 %v432
        %547 = vmatprep.subr.mxu0 0.0
        %548 = vmatpush1.msra.mxu0 0.0
        %549 = vmatprep.subr.mxu0 0.0
        %550 = vmatpush1.msra.mxu0 0.0
        %551 = vmatprep.subr.mxu0 0.0
        %552 = vmatpush1.msra.mxu0 0.0
        %553 = vmatprep.subr.mxu0 0.0
        %554 = vmatpush1.msra.mxu0 0.0
        %555 = vmatprep.subr.mxu0 0.0
        %556 = vmatpush1.msra.mxu0 0.0
        %557 = vmatprep.subr.mxu0 0.0
        %558 = vmatpush1.msra.mxu0 0.0
        %559 = vmatprep.subr.mxu0 0.0
        %560 = vmatpush1.msra.mxu0 0.0
        %561 = vmatprep.subr.mxu0 0.0
        %562 = vmatpush1.msra.mxu0 0.0
        %563 = vmatprep.subr.mxu0 0.0
        %564 = vmatpush1.msra.mxu0 0.0
        %565 = vmatprep.subr.mxu0 0.0
        %566 = vmatpush1.msra.mxu0 0.0
        %567 = vmatprep.subr.mxu0 0.0
        %568 = vmatpush1.msra.mxu0 0.0
        %569 = vmatprep.subr.mxu0 0.0
        %570 = vmatpush1.msra.mxu0 0.0
        %571 = vmatprep.subr.mxu0 0.0
        %572 = vmatpush1.msra.mxu0 0.0
        %573 = vmatprep.subr.mxu0 0.0
        %574 = vmatpush1.msra.mxu0 0.0
        %575 = vmatprep.subr.mxu0 0.0
        %576 = vmatpush1.msra.mxu0 0.0
        %577 = vmatprep.subr.mxu0 0.0
        %578 = vmatpush1.msra.mxu0 0.0
        %579 = vmatprep.mubr.f32.mxu0 0.0
        %580 = vmatmul.mubr.f32.gmra.mrb[0].mxu0 %v514
        %v581 = vpop.f32.mrb[0].mxu0
        %v582 = vadd.f32 %v438, %v581
        %v583 = vpop.f32.mrb[0].mxu0
        %584 = vdwg.mxu0
        %v585 = vmul.f32 %v582, 0.5
        %v586 = vmul.f32 %v582, 0.70710677
        %v587 = verf.f32.pop %v586
        %v588 = vadd.f32 %v587, 1.0
        %v589 = vmul.f32 %v585, %v588
        %v590 = vld [vmem:[#allocation6] sm:$0xff]
        %v591 = vld [vmem:[#allocation6 + $0x8] sm:$0xff]
        %v592 = vld [vmem:[#allocation6 + $0x10] sm:$0xff]
        %v593 = vld [vmem:[#allocation6 + $0x18] sm:$0xff]
        %v594 = vld [vmem:[#allocation6 + $0x20] sm:$0xff]
        %v595 = vld [vmem:[#allocation6 + $0x28] sm:$0xff]
        %v596 = vld [vmem:[#allocation6 + $0x30] sm:$0xff]
        %v597 = vld [vmem:[#allocation6 + $0x38] sm:$0xff]
        %v598 = vld [vmem:[#allocation6 + $0x40] sm:$0xff]
        %v599 = vld [vmem:[#allocation6 + $0x48] sm:$0xff]
        %v600 = vld [vmem:[#allocation6 + $0x50] sm:$0xff]
        %v601 = vld [vmem:[#allocation6 + $0x58] sm:$0xff]
        %v602 = vld [vmem:[#allocation6 + $0x60] sm:$0xff]
        %v603 = vld [vmem:[#allocation6 + $0x68] sm:$0xff]
        %v604 = vld [vmem:[#allocation6 + $0x70] sm:$0xff]
        %v605 = vld [vmem:[#allocation6 + $0x78] sm:$0xff]
        %v606 = vld [vmem:[%s6] sm:$0x1]
        %v608 = vlaneseq
        %v609 = vshrl.u32 %v608, 7
        %v610 = vsub.s32 0, %v609
        %v611 = vrot.slane %v606, %v610
        %613 = vmatprep.subr.mxu0 0.0
        %614 = vmatpush1.msra.mxu0 %v590
        %615 = vmatprep.subr.mxu0 0.0
        %616 = vmatpush1.msra.mxu0 %v591
        %617 = vmatprep.subr.mxu0 0.0
        %618 = vmatpush1.msra.mxu0 %v592
        %619 = vmatprep.subr.mxu0 0.0
        %620 = vmatpush1.msra.mxu0 %v593
        %621 = vmatprep.subr.mxu0 0.0
        %622 = vmatpush1.msra.mxu0 %v594
        %623 = vmatprep.subr.mxu0 0.0
        %624 = vmatpush1.msra.mxu0 %v595
        %625 = vmatprep.subr.mxu0 0.0
        %626 = vmatpush1.msra.mxu0 %v596
        %627 = vmatprep.subr.mxu0 0.0
        %628 = vmatpush1.msra.mxu0 %v597
        %629 = vmatprep.subr.mxu0 0.0
        %630 = vmatpush1.msra.mxu0 %v598
        %631 = vmatprep.subr.mxu0 0.0
        %632 = vmatpush1.msra.mxu0 %v599
        %633 = vmatprep.subr.mxu0 0.0
        %634 = vmatpush1.msra.mxu0 %v600
        %635 = vmatprep.subr.mxu0 0.0
        %636 = vmatpush1.msra.mxu0 %v601
        %637 = vmatprep.subr.mxu0 0.0
        %638 = vmatpush1.msra.mxu0 %v602
        %639 = vmatprep.subr.mxu0 0.0
        %640 = vmatpush1.msra.mxu0 %v603
        %641 = vmatprep.subr.mxu0 0.0
        %642 = vmatpush1.msra.mxu0 %v604
        %643 = vmatprep.subr.mxu0 0.0
        %644 = vmatpush1.msra.mxu0 %v605
        %645 = vmatprep.subr.mxu0 0.0
        %646 = vmatpush1.msra.mxu0 0.0
        %647 = vmatprep.subr.mxu0 0.0
        %648 = vmatpush1.msra.mxu0 0.0
        %649 = vmatprep.subr.mxu0 0.0
        %650 = vmatpush1.msra.mxu0 0.0
        %651 = vmatprep.subr.mxu0 0.0
        %652 = vmatpush1.msra.mxu0 0.0
        %653 = vmatprep.subr.mxu0 0.0
        %654 = vmatpush1.msra.mxu0 0.0
        %655 = vmatprep.subr.mxu0 0.0
        %656 = vmatpush1.msra.mxu0 0.0
        %657 = vmatprep.subr.mxu0 0.0
        %658 = vmatpush1.msra.mxu0 0.0
        %659 = vmatprep.subr.mxu0 0.0
        %660 = vmatpush1.msra.mxu0 0.0
        %661 = vmatprep.subr.mxu0 0.0
        %662 = vmatpush1.msra.mxu0 0.0
        %663 = vmatprep.subr.mxu0 0.0
        %664 = vmatpush1.msra.mxu0 0.0
        %665 = vmatprep.subr.mxu0 0.0
        %666 = vmatpush1.msra.mxu0 0.0
        %667 = vmatprep.subr.mxu0 0.0
        %668 = vmatpush1.msra.mxu0 0.0
        %669 = vmatprep.subr.mxu0 0.0
        %670 = vmatpush1.msra.mxu0 0.0
        %671 = vmatprep.subr.mxu0 0.0
        %672 = vmatpush1.msra.mxu0 0.0
        %673 = vmatprep.subr.mxu0 0.0
        %674 = vmatpush1.msra.mxu0 0.0
        %675 = vmatprep.subr.mxu0 0.0
        %676 = vmatpush1.msra.mxu0 0.0
        %677 = vmatprep.mubr.f32.mxu0 0.0
        %678 = vmatmul.mubr.f32.gmra.mrb[0].mxu0 %v589
        %v679 = vpop.f32.mrb[0].mxu0
        %v680 = vadd.f32 %v611, %v679
        %v681 = vpop.f32.mrb[0].mxu0
        %682 = vdwg.mxu0
        %683 = vst [vmem:[%s317] sm:$0xff] %v680
        %p684 = scmp.lt.s32.totalorder %s20, 1
        %s685 = scalar_select %p684, %s20, 1
        %s686 = smul.addr %s685, 8
        %s687 = scalar_lea.vmem %s7, %s686
        // Predicated region
        $region61: #{net_forward.1} parent=47 // pred_check
          %p688 = pneg %p190
        $region62: #{net_forward.1} parent=47 // pred_check_branch
          %690 = sbr.rel (%p688) target = $region64
        $region63: #{net_forward.1} parent=47 // pred_region
          _
        $region64: #{net_forward.1} parent=47 // pred_fallthru
          _
      $region48: #{net_forward.1} parent=5 // pred_fallthru
        _
      %p691 = scmp.le.s32.totalorder 2, %s15
      // Predicated region
      $region65: #{net_forward.1} parent=5 // pred_check
        %p692 = pneg %p691
      $region66: #{net_forward.1} parent=5 // pred_check_branch
        %694 = sbr.rel (%p692) target = $region68
      $region67: #{net_forward.1} parent=5 // pred_region
        %s695 = ssub.s32 %s15, 2
        // Predicated region
        $region69: #{net_forward.1} parent=67 // pred_check
          %p696 = pneg %p196
        $region70: #{net_forward.1} parent=67 // pred_check_branch
          %698 = sbr.rel (%p696) target = $region72
        $region71: #{net_forward.1} parent=67 // pred_region
          %p699 = scmp.lt.s32.totalorder %s21, 1
          %s700 = scalar_select %p699, %s21, 1
          %s701 = smul.addr %s700, 8
          %s702 = scalar_lea.vmem %s7, %s701
        $region72: #{net_forward.1} parent=67 // pred_fallthru
          _
      $region68: #{net_forward.1} parent=5 // pred_fallthru
        _
    $region6: #{net_forward.1} parent=1 // loop_footer
      %s19 = sadd.s32 1, %s15
    $region7: #{net_forward.1} parent=1 // loop_footer_branch
      %14 = sbr.rel target = $region3
    $region8: #{net_forward.1} parent=1 // loop_exit
      _
    %703 = vsyncpa [#allocation3], 1
    %s704 = scalar_lea.sflag [#allocation3], 1
    %705 = vsyncpa %s704, 1
    %706 = vsyncpa [#allocation5], 1

</llo_original>
